<compile_context>
chip_gen: v5e
topology: v5e:2x2
jax: 0.10.0
libtpu: 0.0.40
codegen_flags: <defaults>
</compile_context>

<pallas_src>
import functools

import jax
import jax.numpy as jnp
from jax.experimental import pallas as pl
from jax.experimental.pallas import tpu as pltpu

# Only affects the pure-JAX reference (the kernels use no matmuls); keeps the reference
# at full f32 accuracy so the tolerance check is meaningful.
jax.config.update("jax_default_matmul_precision", "highest")

_SMEM_SPEC = pl.BlockSpec(memory_space=pltpu.MemorySpace.SMEM)


# ---------------------------------------------------------------------------
# Kernel 1: fuzzy membership + pooling reduction over HW; SE feed-forward gate
#           computed in the finalize step of the last HW tile.
#   pooled[b, i, c] = mean_hw exp(-((x[b,c,hw]-mu_i)/sigma_i)^2)
#   gate[b, c]      = sigmoid(w2 @ silu(BN(w1 @ pooled_flat + b1)) + b2) (+1 if residual)
# ---------------------------------------------------------------------------
def _pool_gate_kernel(mu_ref, nis_ref,            # SMEM: (n,) mu_i, (n,) -1/sigma_i^2
                      x_ref,                       # VMEM: (1, C, hw_tile) input tile
                      w1c_ref, b1_ref,             # VMEM: (n, C, hidden), (1, hidden)  (BN folded)
                      w2_ref, b2_ref,              # VMEM: (C, hidden), (C, 1)
                      gate_ref,                    # out:  (1, C, 1) f32
                      acc_ref,                     # scratch: (n, C, 1) f32
                      *, n, hw, hw_tile, inv_hw, residual, ragged):
    t = pl.program_id(1)

    @pl.when(t == 0)
    def _init():
        acc_ref[...] = jnp.zeros_like(acc_ref)     # tiny: n*C*4 bytes

    if ragged:
        # Mask lanes past the end of HW on the ragged last tile (padding is undefined).
        lane = jax.lax.broadcasted_iota(jnp.int32, (x_ref.shape[1], hw_tile), 1)
        valid = (t * hw_tile + lane) < hw

    # Hot loop: sub + 2x mul (VPU) + exp (EUP) + lane reduce (VPU/XLU).  No divide,
    # no full-width accumulator traffic.  Cast per use so load+convert fuse (bf16 in).
    for i in range(n):
        xi = x_ref[0].astype(jnp.float32)                         # (C, hw_tile)
        d = xi - mu_ref[i]
        m = jnp.exp(d * d * nis_ref[i])
        if ragged:
            m = jnp.where(valid, m, 0.0)
        acc_ref[i] += jnp.sum(m, axis=-1, keepdims=True)          # (C, 1)

    @pl.when(t == pl.num_programs(1) - 1)
    def _finalize():
        sums = acc_ref[...] * inv_hw                              # (n, C, 1)
        # Tiny feed-forward on the pooled vector, once per batch row (exact f32).
        # Layer 1 reduces over C (sublane); small and off the hot loop.
        h = b1_ref[...]                                           # (1, hidden)
        for i in range(n):
            h = h + jnp.sum(w1c_ref[i] * sums[i], axis=0, keepdims=True)
        h = h * (1.0 / (1.0 + jnp.exp(-h)))                       # SiLU
        o = jnp.sum(w2_ref[...] * h, axis=-1, keepdims=True) + b2_ref[...]   # (C, 1)
        g = 1.0 / (1.0 + jnp.exp(-o))                             # Sigmoid
        if residual:
            g = g + 1.0               # fold residual: (g+1)*x == g*x + x
        gate_ref[0] = g


# ---------------------------------------------------------------------------
# Kernel 2: per-channel gating (residual already folded into gate)
#   out[b, c, hw] = gate[b, c] * x[b, c, hw]
# ---------------------------------------------------------------------------
def _scale_kernel(g_ref, x_ref, o_ref, *, compute_dtype):
    # Compute in the input dtype (bf16 stays bf16 on v6e/v7x; f32 inputs stay f32).
    g = g_ref[...].astype(compute_dtype)                          # (1, C, 1)
    o_ref[...] = (x_ref[...].astype(compute_dtype) * g).astype(o_ref.dtype)


# ---------------------------------------------------------------------------
# Tile sizing: largest lane tile (multiple of 128, or full HW) whose double-buffered
# working set for BOTH kernels fits the VMEM budget.  Accounts for the actual input
# dtype width and the (single-buffered) weight blocks.  Returns (tile, num_tiles, ragged).
# ---------------------------------------------------------------------------
def _pick_hw_tile(hw, c, n, hidden, x_bytes, budget_bytes, max_hw_tile=None):
    weights = (n * c * hidden + hidden + c * hidden + c) * 4      # single-buffered (f32)
    fixed_k1 = weights + n * c * 4 + 2 * c * 4                    # + acc + gate out (2x)
    fixed_k2 = 2 * c * 4                                          # gate in (2x)
    per_lane_k1 = 2 * c * x_bytes                                 # x tile, double-buffered
    per_lane_k2 = 4 * c * x_bytes                                 # x + out, double-buffered
    cap = min((budget_bytes - fixed_k1) // max(per_lane_k1, 1),
              (budget_bytes - fixed_k2) // max(per_lane_k2, 1))
    cap = max(cap, 128)
    if max_hw_tile is not None:
        cap = max(min(cap, max_hw_tile), 128)
    if hw <= cap:
        return hw, 1, False           # single tile; block == full dim is always legal
    tile = max((cap // 128) * 128, 128)
    # Prefer an exact divisor of HW (no masked tail) if one exists near the cap.
    best_div, t = 0, 128
    while t <= tile:
        if hw % t == 0:
            best_div = t
        t += 128
    if best_div >= max(tile // 2, 128):
        tile = best_div
    num_tiles = -(-hw // tile)
    return tile, num_tiles, (hw % tile != 0)


# ---------------------------------------------------------------------------
# Module wrapper (host-side work: parameter folding on tiny (hidden,)/(C,) arrays)
# ---------------------------------------------------------------------------
def fuzzy_channel_att_inblock(x, params, *, residual=True,
                              vmem_budget_bytes=24 * 1024 * 1024,
                              max_hw_tile=None):
    B, C, H, W = x.shape
    HW = H * W
    mu = params["mu"].astype(jnp.float32)
    sigma = params["sigma"].astype(jnp.float32)
    n = mu.shape[0]
    hidden = params["w1"].shape[0]

    x_flat = x.reshape(B, C, HW)                                  # no dtype cast here

    # Host-side folding (all tiny):
    neg_inv_sigma2 = -1.0 / (sigma * sigma)                       # multiply, not divide, in-kernel
    eps = 1e-5
    bn_scale = params["bn_gamma"] / jnp.sqrt(params["bn_var"] + eps)
    bn_beta, bn_mean = params["bn_beta"], params["bn_mean"]
    w1_eff = params["w1"] * bn_scale[:, None]                     # (hidden, n*C)
    b1_eff = bn_scale * (params["b1"] - bn_mean) + bn_beta        # (hidden,)
    # (hidden, n*C) -> (n, C, hidden): C on sublanes / hidden on lanes in-kernel
    w1c = jnp.transpose(w1_eff.reshape(hidden, n, C), (1, 2, 0)).astype(jnp.float32)
    b1_row = b1_eff[None, :].astype(jnp.float32)                  # (1, hidden)
    w2 = params["w2"].astype(jnp.float32)                         # (C, hidden)
    b2_col = params["b2"][:, None].astype(jnp.float32)            # (C, 1)

    x_bytes = jnp.dtype(x.dtype).itemsize
    hw_tile, num_tiles, ragged = _pick_hw_tile(
        HW, C, n, hidden, x_bytes, vmem_budget_bytes, max_hw_tile)
    grid = (B, num_tiles)

    # Scoped-VMEM limit: real working set + headroom, clamped to [16 MiB, 48 MiB]
    # (safe on v7x's 64 MiB physical; plenty below v5e/v6e's 128 MiB).
    weights_bytes = (n * C * hidden + hidden + C * hidden + C) * 4
    k1_ws = weights_bytes + n * C * 4 + 2 * C * 4 + 2 * C * hw_tile * x_bytes
    k2_ws = 2 * C * 4 + 4 * C * hw_tile * x_bytes
    vmem_limit = int(min(max((max(k1_ws, k2_ws) * 5) // 4 + (4 << 20), 16 << 20), 48 << 20))

    # --- pallas_call 1: pool + feed-forward gate ----------------------------
    gate = pl.pallas_call(
        functools.partial(_pool_gate_kernel, n=n, hw=HW, hw_tile=hw_tile,
                          inv_hw=1.0 / HW, residual=residual, ragged=ragged),
        out_shape=jax.ShapeDtypeStruct((B, C, 1), jnp.float32),
        grid_spec=pltpu.PrefetchScalarGridSpec(
            num_scalar_prefetch=0,
            grid=grid,
            in_specs=[
                _SMEM_SPEC,                                             # mu (n,)
                _SMEM_SPEC,                                             # -1/sigma^2 (n,)
                pl.BlockSpec((1, C, hw_tile), lambda b, t: (b, 0, t)),  # x tile
                pl.BlockSpec((n, C, hidden), lambda b, t: (0, 0, 0),    # w1 (BN folded)
                             pipeline_mode=pl.Buffered(1)),
                pl.BlockSpec((1, hidden), lambda b, t: (0, 0),          # b1 (BN folded)
                             pipeline_mode=pl.Buffered(1)),
                pl.BlockSpec((C, hidden), lambda b, t: (0, 0),          # w2
                             pipeline_mode=pl.Buffered(1)),
                pl.BlockSpec((C, 1), lambda b, t: (0, 0),               # b2
                             pipeline_mode=pl.Buffered(1)),
            ],
            out_specs=pl.BlockSpec((1, C, 1), lambda b, t: (b, 0, 0)),
            scratch_shapes=[pltpu.VMEM((n, C, 1), jnp.float32)],        # narrow accumulator
        ),
        compiler_params=pltpu.CompilerParams(
            dimension_semantics=("parallel", "arbitrary"),
            vmem_limit_bytes=vmem_limit),
    )(mu, neg_inv_sigma2, x_flat, w1c, b1_row, w2, b2_col)

    # --- pallas_call 2: gate * x (residual folded into gate) ----------------
    if x.dtype in (jnp.dtype(jnp.bfloat16), jnp.dtype(jnp.float16), jnp.dtype(jnp.float32)):
        compute_dtype = x.dtype
    else:
        compute_dtype = jnp.float32

    out_flat = pl.pallas_call(
        functools.partial(_scale_kernel, compute_dtype=compute_dtype),
        out_shape=jax.ShapeDtypeStruct((B, C, HW), x.dtype),
        grid_spec=pltpu.PrefetchScalarGridSpec(
            num_scalar_prefetch=0,
            grid=grid,
            in_specs=[
                pl.BlockSpec((1, C, 1), lambda b, t: (b, 0, 0)),        # gate
                pl.BlockSpec((1, C, hw_tile), lambda b, t: (b, 0, t)),  # x tile
            ],
            out_specs=pl.BlockSpec((1, C, hw_tile), lambda b, t: (b, 0, t)),
        ),
        compiler_params=pltpu.CompilerParams(
            dimension_semantics=("parallel", "parallel"),
            vmem_limit_bytes=vmem_limit),
    )(gate, x_flat)

    return out_flat.reshape(B, C, H, W)


# ---------------------------------------------------------------------------
# Parameter init (mirrors the PyTorch module; sigma kept away from 0 so the
# random test params are not degenerate)
# ---------------------------------------------------------------------------
def init_params(key, channel, n, squeeze=4):
    plane = n * channel
    hidden = plane // squeeze
    ks = jax.random.split(key, 9)
    return dict(
        mu=jax.random.normal(ks[0], (n,), jnp.float32),
        sigma=jnp.abs(jax.random.normal(ks[1], (n,), jnp.float32)) + 0.5,
        w1=jax.random.normal(ks[2], (hidden, plane), jnp.float32) * 0.2,   # Conv2d(plane, hidden, 1)
        b1=jax.random.normal(ks[3], (hidden,), jnp.float32) * 0.1,
        bn_gamma=1.0 + 0.1 * jax.random.normal(ks[4], (hidden,), jnp.float32),
        bn_beta=0.1 * jax.random.normal(ks[5], (hidden,), jnp.float32),
        bn_mean=0.1 * jax.random.normal(ks[6], (hidden,), jnp.float32),
        bn_var=jnp.abs(jax.random.normal(ks[7], (hidden,), jnp.float32)) * 0.1 + 0.9,
        w2=jax.random.normal(ks[8], (channel, hidden), jnp.float32) * 0.2,  # Conv2d(hidden, channel, 1)
        b2=jnp.zeros((channel,), jnp.float32),
    )


# ---------------------------------------------------------------------------
# Pure-JAX reference (mirrors the PyTorch forward, eval-mode BN)
# ---------------------------------------------------------------------------
def reference(x, params, residual=True):
    B, C, H, W = x.shape
    mu = params["mu"].reshape(-1, 1, 1, 1)
    sigma = params["sigma"].reshape(-1, 1, 1, 1)
    xu = x[:, None].astype(jnp.float32)                          # (B, 1, C, H, W)
    tmp = -(((xu - mu) / sigma) ** 2)                            # (B, n, C, H, W)
    pooled = jnp.mean(jnp.exp(tmp), axis=(3, 4)).reshape(B, -1)  # (B, n*C)
    h = pooled @ params["w1"].T + params["b1"]
    eps = 1e-5
    scale = params["bn_gamma"] / jnp.sqrt(params["bn_var"] + eps)
    shift = params["bn_beta"] - params["bn_mean"] * scale
    h = h * scale + shift
    h = h * jax.nn.sigmoid(h)                                    # SiLU
    gate = jax.nn.sigmoid(h @ params["w2"].T + params["b2"])     # (B, C)
    g = gate[:, :, None, None]
    y = g * x
    if residual:
        y = y + x
    return y.astype(x.dtype)


if __name__ == "__main__":
    key = jax.random.PRNGKey(0)

    # Test 1: HW divisible by 128; max_hw_tile=128 -> 2 HW tiles, exercising the
    # grid reduction with the narrow accumulator.
    B, C, H, W = 2, 4, 16, 16
    n, squeeze = 2, 4
    kx, kp, key = jax.random.split(key, 3)
    x = jax.random.normal(kx, (B, C, H, W), jnp.float32)
    params = init_params(kp, C, n, squeeze)
    out = jax.block_until_ready(
        fuzzy_channel_att_inblock(x, params, residual=True, max_hw_tile=128))
    ref = reference(x, params, residual=True)
    assert out.shape == ref.shape and out.dtype == ref.dtype
    err = float(jnp.max(jnp.abs(out - ref)))
    assert jnp.allclose(out, ref, atol=2e-5, rtol=2e-5), f"mismatch(test1): max err {err}"

    # Test 2: HW = 400 (20x20, typical YOLO map, not a multiple of 128);
    # max_hw_tile=256 -> cdiv grid with a masked ragged last tile.
    B2, C2, H2, W2 = 1, 8, 20, 20
    n2, squeeze2 = 3, 4
    kx2, kp2, key = jax.random.split(key, 3)
    x2 = jax.random.normal(kx2, (B2, C2, H2, W2), jnp.float32)
    params2 = init_params(kp2, C2, n2, squeeze2)
    out2 = jax.block_until_ready(
        fuzzy_channel_att_inblock(x2, params2, residual=True, max_hw_tile=256))
    ref2 = reference(x2, params2, residual=True)
    assert out2.shape == ref2.shape and out2.dtype == ref2.dtype
    err2 = float(jnp.max(jnp.abs(out2 - ref2)))
    assert jnp.allclose(out2, ref2, atol=2e-5, rtol=2e-5), f"mismatch(test2): max err {err2}"

    print("KERNEL_OK")
</pallas_src>

<mosaic_0001>
module attributes {stable_mosaic.version = 11 : i64} {
  func.func @_pool_gate_kernel(%arg0: i32, %arg1: i32, %arg2: memref<2xf32, #tpu.memory_space<smem>>, %arg3: memref<2xf32, #tpu.memory_space<smem>>, %arg4: memref<1x4x128xf32, #tpu.memory_space<vmem>>, %arg5: memref<2x4x2xf32, #tpu.memory_space<vmem>>, %arg6: memref<1x2xf32, #tpu.memory_space<vmem>>, %arg7: memref<4x2xf32, #tpu.memory_space<vmem>>, %arg8: memref<4x1xf32, #tpu.memory_space<vmem>>, %arg9: memref<1x4x1xf32, #tpu.memory_space<vmem>>, %arg10: memref<2x4x1xf32, #tpu.memory_space<vmem>>) attributes {dimension_semantics = [#tpu.dimension_semantics<parallel>, #tpu.dimension_semantics<arbitrary>], iteration_bounds = array<i64: 2, 2>, scalar_prefetch = 0 : i64, scratch_operands = 1 : i64, tpu.core_type = #tpu.core_type<tc>, window_params = [{transform_indices = @transform_0, window_bounds = array<i64: 2>}, {transform_indices = @transform_1, window_bounds = array<i64: 2>}, {transform_indices = @transform_2, window_bounds = array<i64: 1, 4, 128>}, {pipeline_mode = #tpu.pipeline_mode<synchronous>, transform_indices = @transform_3, window_bounds = array<i64: 2, 4, 2>}, {pipeline_mode = #tpu.pipeline_mode<synchronous>, transform_indices = @transform_4, window_bounds = array<i64: 1, 2>}, {pipeline_mode = #tpu.pipeline_mode<synchronous>, transform_indices = @transform_5, window_bounds = array<i64: 4, 2>}, {pipeline_mode = #tpu.pipeline_mode<synchronous>, transform_indices = @transform_6, window_bounds = array<i64: 4, 1>}, {transform_indices = @transform_7, window_bounds = array<i64: 1, 4, 1>}]} {
    %c0_i32 = arith.constant 0 : i32
    %0 = arith.cmpi eq, %arg1, %c0_i32 : i32
    %1 = arith.extui %0 : i1 to i32
    %c0_i32_0 = arith.constant 0 : i32
    %2 = arith.cmpi ne, %1, %c0_i32_0 : i32
    scf.if %2 {
      %cst_23 = arith.constant 0.000000e+00 : f32
      %42 = vector.broadcast %cst_23 : f32 to vector<2x4x1xf32>
      %c0_24 = arith.constant 0 : index
      %c0_25 = arith.constant 0 : index
      %c0_26 = arith.constant 0 : index
      %43 = vector.load %arg10[%c0_24, %c0_25, %c0_26] : memref<2x4x1xf32, #tpu.memory_space<vmem>>, vector<2x4x1xf32>
      tpu.vector_store %arg10[%c0_24, %c0_25, %c0_26], %42 {strides = array<i32>} : memref<2x4x1xf32, #tpu.memory_space<vmem>>, vector<2x4x1xf32>,
    } else {
    }
    %c0 = arith.constant 0 : index
    %c0_1 = arith.constant 0 : index
    %c0_2 = arith.constant 0 : index
    %3 = vector.load %arg4[%c0, %c0_1, %c0_2] : memref<1x4x128xf32, #tpu.memory_space<vmem>>, vector<1x4x128xf32>
    %4 = vector.shape_cast %3 : vector<1x4x128xf32> to vector<4x128xf32>
    %c0_3 = arith.constant 0 : index
    %5 = memref.load %arg2[%c0_3] : memref<2xf32, #tpu.memory_space<smem>>
    %6 = vector.broadcast %5 : f32 to vector<4x128xf32>
    %7 = arith.subf %4, %6 : vector<4x128xf32>
    %8 = arith.mulf %7, %7 : vector<4x128xf32>
    %c0_4 = arith.constant 0 : index
    %9 = memref.load %arg3[%c0_4] : memref<2xf32, #tpu.memory_space<smem>>
    %10 = vector.broadcast %9 : f32 to vector<4x128xf32>
    %11 = arith.mulf %8, %10 : vector<4x128xf32>
    %12 = math.exp %11 : vector<4x128xf32>
    %c0_5 = arith.constant 0 : index
    %c0_6 = arith.constant 0 : index
    %c0_7 = arith.constant 0 : index
    %13 = vector.load %arg10[%c0_5, %c0_6, %c0_7] : memref<2x4x1xf32, #tpu.memory_space<vmem>>, vector<1x4x1xf32>
    %14 = vector.shape_cast %13 : vector<1x4x1xf32> to vector<4x1xf32>
    %cst = arith.constant dense<0.000000e+00> : vector<4xf32>
    %15 = vector.multi_reduction <add>, %12, %cst [1] : vector<4x128xf32> to vector<4xf32>
    %16 = vector.shape_cast %15 : vector<4xf32> to vector<4x1xf32>
    %17 = arith.addf %14, %16 : vector<4x1xf32>
    %c0_8 = arith.constant 0 : index
    %c0_9 = arith.constant 0 : index
    %c0_10 = arith.constant 0 : index
    %18 = vector.load %arg10[%c0_8, %c0_9, %c0_10] : memref<2x4x1xf32, #tpu.memory_space<vmem>>, vector<1x4x1xf32>
    %19 = vector.shape_cast %18 : vector<1x4x1xf32> to vector<4x1xf32>
    %20 = vector.shape_cast %17 : vector<4x1xf32> to vector<1x4x1xf32>
    tpu.vector_store %arg10[%c0_8, %c0_9, %c0_10], %20 {strides = array<i32>} : memref<2x4x1xf32, #tpu.memory_space<vmem>>, vector<1x4x1xf32>,
    %c0_11 = arith.constant 0 : index
    %c0_12 = arith.constant 0 : index
    %c0_13 = arith.constant 0 : index
    %21 = vector.load %arg4[%c0_11, %c0_12, %c0_13] : memref<1x4x128xf32, #tpu.memory_space<vmem>>, vector<1x4x128xf32>
    %22 = vector.shape_cast %21 : vector<1x4x128xf32> to vector<4x128xf32>
    %c1 = arith.constant 1 : index
    %23 = memref.load %arg2[%c1] : memref<2xf32, #tpu.memory_space<smem>>
    %24 = vector.broadcast %23 : f32 to vector<4x128xf32>
    %25 = arith.subf %22, %24 : vector<4x128xf32>
    %26 = arith.mulf %25, %25 : vector<4x128xf32>
    %c1_14 = arith.constant 1 : index
    %27 = memref.load %arg3[%c1_14] : memref<2xf32, #tpu.memory_space<smem>>
    %28 = vector.broadcast %27 : f32 to vector<4x128xf32>
    %29 = arith.mulf %26, %28 : vector<4x128xf32>
    %30 = math.exp %29 : vector<4x128xf32>
    %c1_15 = arith.constant 1 : index
    %c0_16 = arith.constant 0 : index
    %c0_17 = arith.constant 0 : index
    %31 = vector.load %arg10[%c1_15, %c0_16, %c0_17] : memref<2x4x1xf32, #tpu.memory_space<vmem>>, vector<1x4x1xf32>
    %32 = vector.shape_cast %31 : vector<1x4x1xf32> to vector<4x1xf32>
    %cst_18 = arith.constant dense<0.000000e+00> : vector<4xf32>
    %33 = vector.multi_reduction <add>, %30, %cst_18 [1] : vector<4x128xf32> to vector<4xf32>
    %34 = vector.shape_cast %33 : vector<4xf32> to vector<4x1xf32>
    %35 = arith.addf %32, %34 : vector<4x1xf32>
    %c1_19 = arith.constant 1 : index
    %c0_20 = arith.constant 0 : index
    %c0_21 = arith.constant 0 : index
    %36 = vector.load %arg10[%c1_19, %c0_20, %c0_21] : memref<2x4x1xf32, #tpu.memory_space<vmem>>, vector<1x4x1xf32>
    %37 = vector.shape_cast %36 : vector<1x4x1xf32> to vector<4x1xf32>
    %38 = vector.shape_cast %35 : vector<4x1xf32> to vector<1x4x1xf32>
    tpu.vector_store %arg10[%c1_19, %c0_20, %c0_21], %38 {strides = array<i32>} : memref<2x4x1xf32, #tpu.memory_space<vmem>>, vector<1x4x1xf32>,
    %c1_i32 = arith.constant 1 : i32
    %39 = arith.cmpi eq, %arg1, %c1_i32 : i32
    %40 = arith.extui %39 : i1 to i32
    %c0_i32_22 = arith.constant 0 : i32
    %41 = arith.cmpi ne, %40, %c0_i32_22 : i32
    scf.if %41 {
      %c0_23 = arith.constant 0 : index
      %c0_24 = arith.constant 0 : index
      %c0_25 = arith.constant 0 : index
      %42 = vector.load %arg10[%c0_23, %c0_24, %c0_25] : memref<2x4x1xf32, #tpu.memory_space<vmem>>, vector<2x4x1xf32>
      %cst_26 = arith.constant 3.906250e-03 : f32
      %43 = vector.broadcast %cst_26 : f32 to vector<2x4x1xf32>
      %44 = arith.mulf %42, %43 : vector<2x4x1xf32>
      %c0_27 = arith.constant 0 : index
      %c0_28 = arith.constant 0 : index
      %45 = vector.load %arg6[%c0_27, %c0_28] : memref<1x2xf32, #tpu.memory_space<vmem>>, vector<1x2xf32>
      %c0_29 = arith.constant 0 : index
      %c0_30 = arith.constant 0 : index
      %c0_31 = arith.constant 0 : index
      %46 = vector.load %arg5[%c0_29, %c0_30, %c0_31] : memref<2x4x2xf32, #tpu.memory_space<vmem>>, vector<1x4x2xf32>
      %47 = vector.shape_cast %46 : vector<1x4x2xf32> to vector<4x2xf32>
      %48 = vector.extract_strided_slice %44 {offsets = [0, 0, 0], sizes = [1, 4, 1], strides = [1, 1, 1]} : vector<2x4x1xf32> to vector<1x4x1xf32>
      %49 = vector.shape_cast %48 : vector<1x4x1xf32> to vector<4x1xf32>
      %50 = vector.broadcast %49 : vector<4x1xf32> to vector<4x2xf32>
      %51 = arith.mulf %47, %50 : vector<4x2xf32>
      %cst_32 = arith.constant dense<0.000000e+00> : vector<2xf32>
      %52 = vector.multi_reduction <add>, %51, %cst_32 [0] : vector<4x2xf32> to vector<2xf32>
      %53 = vector.shape_cast %52 : vector<2xf32> to vector<1x2xf32>
      %54 = arith.addf %45, %53 : vector<1x2xf32>
      %c1_33 = arith.constant 1 : index
      %c0_34 = arith.constant 0 : index
      %c0_35 = arith.constant 0 : index
      %55 = vector.load %arg5[%c1_33, %c0_34, %c0_35] : memref<2x4x2xf32, #tpu.memory_space<vmem>>, vector<1x4x2xf32>
      %56 = vector.shape_cast %55 : vector<1x4x2xf32> to vector<4x2xf32>
      %57 = vector.extract_strided_slice %44 {offsets = [1, 0, 0], sizes = [1, 4, 1], strides = [1, 1, 1]} : vector<2x4x1xf32> to vector<1x4x1xf32>
      %58 = vector.shape_cast %57 : vector<1x4x1xf32> to vector<4x1xf32>
      %59 = vector.broadcast %58 : vector<4x1xf32> to vector<4x2xf32>
      %60 = arith.mulf %56, %59 : vector<4x2xf32>
      %cst_36 = arith.constant dense<0.000000e+00> : vector<2xf32>
      %61 = vector.multi_reduction <add>, %60, %cst_36 [0] : vector<4x2xf32> to vector<2xf32>
      %62 = vector.shape_cast %61 : vector<2xf32> to vector<1x2xf32>
      %63 = arith.addf %54, %62 : vector<1x2xf32>
      %cst_37 = arith.constant 0.000000e+00 : f32
      %64 = vector.broadcast %cst_37 : f32 to vector<1x2xf32>
      %65 = arith.subf %64, %63 : vector<1x2xf32>
      %66 = math.exp %65 : vector<1x2xf32>
      %cst_38 = arith.constant 1.000000e+00 : f32
      %67 = vector.broadcast %cst_38 : f32 to vector<1x2xf32>
      %68 = arith.addf %67, %66 : vector<1x2xf32>
      %cst_39 = arith.constant 1.000000e+00 : f32
      %69 = vector.broadcast %cst_39 : f32 to vector<1x2xf32>
      %70 = arith.divf %69, %68 : vector<1x2xf32>
      %71 = arith.mulf %63, %70 : vector<1x2xf32>
      %c0_40 = arith.constant 0 : index
      %c0_41 = arith.constant 0 : index
      %72 = vector.load %arg7[%c0_40, %c0_41] : memref<4x2xf32, #tpu.memory_space<vmem>>, vector<4x2xf32>
      %73 = vector.broadcast %71 : vector<1x2xf32> to vector<4x2xf32>
      %74 = arith.mulf %72, %73 : vector<4x2xf32>
      %cst_42 = arith.constant dense<0.000000e+00> : vector<4xf32>
      %75 = vector.multi_reduction <add>, %74, %cst_42 [1] : vector<4x2xf32> to vector<4xf32>
      %76 = vector.shape_cast %75 : vector<4xf32> to vector<4x1xf32>
      %c0_43 = arith.constant 0 : index
      %c0_44 = arith.constant 0 : index
      %77 = vector.load %arg8[%c0_43, %c0_44] : memref<4x1xf32, #tpu.memory_space<vmem>>, vector<4x1xf32>
      %78 = arith.addf %76, %77 : vector<4x1xf32>
      %cst_45 = arith.constant 0.000000e+00 : f32
      %79 = vector.broadcast %cst_45 : f32 to vector<4x1xf32>
      %80 = arith.subf %79, %78 : vector<4x1xf32>
      %81 = math.exp %80 : vector<4x1xf32>
      %cst_46 = arith.constant 1.000000e+00 : f32
      %82 = vector.broadcast %cst_46 : f32 to vector<4x1xf32>
      %83 = arith.addf %82, %81 : vector<4x1xf32>
      %cst_47 = arith.constant 1.000000e+00 : f32
      %84 = vector.broadcast %cst_47 : f32 to vector<4x1xf32>
      %85 = arith.divf %84, %83 : vector<4x1xf32>
      %cst_48 = arith.constant 1.000000e+00 : f32
      %86 = vector.broadcast %cst_48 : f32 to vector<4x1xf32>
      %87 = arith.addf %85, %86 : vector<4x1xf32>
      %c0_49 = arith.constant 0 : index
      %c0_50 = arith.constant 0 : index
      %c0_51 = arith.constant 0 : index
      %88 = vector.load %arg9[%c0_49, %c0_50, %c0_51] : memref<1x4x1xf32, #tpu.memory_space<vmem>>, vector<1x4x1xf32>
      %89 = vector.shape_cast %88 : vector<1x4x1xf32> to vector<4x1xf32>
      %90 = vector.shape_cast %87 : vector<4x1xf32> to vector<1x4x1xf32>
      tpu.vector_store %arg9[%c0_49, %c0_50, %c0_51], %90 {strides = array<i32>} : memref<1x4x1xf32, #tpu.memory_space<vmem>>, vector<1x4x1xf32>,
    } else {
    }
    return
  }
  func.func @transform_0(%arg0: i32, %arg1: i32) -> i32 {
    %c0_i32 = arith.constant 0 : i32
    %c0_i32_0 = arith.constant 0 : i32
    return %c0_i32 : i32
  }
  func.func @transform_1(%arg0: i32, %arg1: i32) -> i32 {
    %c0_i32 = arith.constant 0 : i32
    %c0_i32_0 = arith.constant 0 : i32
    return %c0_i32 : i32
  }
  func.func @transform_2(%arg0: i32, %arg1: i32) -> (i32, i32, i32) {
    %c0_i32 = arith.constant 0 : i32
    %c0_i32_0 = arith.constant 0 : i32
    return %arg0, %c0_i32, %arg1 : i32, i32, i32
  }
  func.func @transform_3(%arg0: i32, %arg1: i32) -> (i32, i32, i32) {
    %c0_i32 = arith.constant 0 : i32
    %c0_i32_0 = arith.constant 0 : i32
    %c0_i32_1 = arith.constant 0 : i32
    %c0_i32_2 = arith.constant 0 : i32
    return %c0_i32, %c0_i32_0, %c0_i32_1 : i32, i32, i32
  }
  func.func @transform_4(%arg0: i32, %arg1: i32) -> (i32, i32) {
    %c0_i32 = arith.constant 0 : i32
    %c0_i32_0 = arith.constant 0 : i32
    %c0_i32_1 = arith.constant 0 : i32
    return %c0_i32, %c0_i32_0 : i32, i32
  }
  func.func @transform_5(%arg0: i32, %arg1: i32) -> (i32, i32) {
    %c0_i32 = arith.constant 0 : i32
    %c0_i32_0 = arith.constant 0 : i32
    %c0_i32_1 = arith.constant 0 : i32
    return %c0_i32, %c0_i32_0 : i32, i32
  }
  func.func @transform_6(%arg0: i32, %arg1: i32) -> (i32, i32) {
    %c0_i32 = arith.constant 0 : i32
    %c0_i32_0 = arith.constant 0 : i32
    %c0_i32_1 = arith.constant 0 : i32
    return %c0_i32, %c0_i32_0 : i32, i32
  }
  func.func @transform_7(%arg0: i32, %arg1: i32) -> (i32, i32, i32) {
    %c0_i32 = arith.constant 0 : i32
    %c0_i32_0 = arith.constant 0 : i32
    %c0_i32_1 = arith.constant 0 : i32
    return %arg0, %c0_i32, %c0_i32_0 : i32, i32, i32
  }
}

</mosaic_0001>

<llo_original>
// kernel: tpu_custom_call.1
$region0: #{tpu_custom_call.1}
  #allocation0 [shape = 'u32[]', space=smem, size = 0x4, offset = 0x4, fixed_abs, tag = 'smem constant byte address 0x4 - core index']
  #allocation1 [shape = 'u32[72,128]{1,0:T(1,128)}', space=vmem, size = 0x9000, scoped, tag = 'internal scratch']
  #allocation2 [shape = 'f32[2,4,1]{2,1,0:T(4,128)}', space=vmem, size = 0x1000, scoped, tag = 'scratch operand']
  %s0 = inlined_call_operand.vmem [shape: f32[2], index: 0, kind: input, shape index: {}]
  %s1 = inlined_call_operand.vmem [shape: f32[2], index: 1, kind: input, shape index: {}]
  %s2 = inlined_call_operand.vmem [shape: f32[2,4,256], index: 2, kind: input, shape index: {}]
  %s3 = inlined_call_operand.vmem [shape: f32[2,4,2], index: 3, kind: input, shape index: {}]
  %s4 = inlined_call_operand.vmem [shape: f32[1,2], index: 4, kind: input, shape index: {}]
  %s5 = inlined_call_operand.vmem [shape: f32[4,2], index: 5, kind: input, shape index: {}]
  %s6 = inlined_call_operand.vmem [shape: f32[4,1], index: 6, kind: input, shape index: {}]
  %s7 = inlined_call_operand.vmem [shape: f32[2,4,1], index: 7, kind: output, shape index: {}]
  %s8 = sld [smem:[#allocation0]]
  $region77: #{tpu_custom_call.1} parent=0
    _
  %s10 = ssub.s32 1, %s8
  %s11 = scalar_select 0, %s10, %s8
  $region1: #{tpu_custom_call.1} parent=0
    #allocation3 [shape = 'u8[512]{0}', space=smem, size = 0x200, scoped, tag = 'input window, operand 0, single buffered']
    #allocation4 [shape = 's32[2]{0}', space=sflag, size = 0x8, scoped, tag = 'scoped memory for tpu_custom_call.1']
    #allocation5 [shape = 'u8[512]{0}', space=smem, size = 0x200, scoped, tag = 'input window, operand 1, single buffered']
    #allocation6 [shape = 's32[1]{0}', space=sflag, size = 0x4, scoped, tag = 'scoped memory for tpu_custom_call.1']
    %12 = vsyncpa [#allocation4], 0
    %13 = vsyncpa [#allocation6], 0
    loop: start=0, step=1, limit=6
    $region2: #{tpu_custom_call.1} parent=1 // loop_pre_header
      _
    $region3: #{tpu_custom_call.1} parent=1 // loop_header
      %s15 = sphi 0, %s19
      %p16 = scmp.ge.s32.totalorder %s15, 6
      %s22 = sphi 0, %s34
      %s23 = sphi 0, %s30
      %s24 = sphi 0, %s22
      %s25 = sphi 0, %s23
      %s26 = sphi 0, %s24
      %s27 = sphi 0, %s25
      %s35 = sphi 0, %s35
      %s37 = sphi 0, %s35
      %s38 = sphi 0, %s37
      %s52 = sphi 0, %s38
      %s56 = sphi 0, %s56
      %s58 = sphi 0, %s56
      %s59 = sphi 0, %s58
      %s73 = sphi 0, %s59
      %s81 = sphi 0, %s83
      %s84 = sphi 0, %s81
      %s85 = sphi 0, %s84
      %s101 = sphi 0, %s85
      %s105 = sphi 0, %s105
      %s107 = sphi 0, %s105
      %s108 = sphi 0, %s107
      %s122 = sphi 0, %s108
      %s126 = sphi 0, %s126
      %s128 = sphi 0, %s126
      %s129 = sphi 0, %s128
      %s143 = sphi 0, %s129
      %s147 = sphi 0, %s147
      %s149 = sphi 0, %s147
      %s150 = sphi 0, %s149
      %s164 = sphi 0, %s150
      %s168 = sphi 0, %s168
      %s170 = sphi 0, %s168
      %s171 = sphi 0, %s170
      %s185 = sphi 0, %s171
      %s191 = sphi 0, %s193
      %s194 = sphi 0, %s191
      %s195 = sphi 0, %s194
      %s211 = sphi 0, %s195
    $region4: #{tpu_custom_call.1} parent=1 // loop_header_branch
      %18 = sbr.rel (%p16) target = $region8
    $region5: #{tpu_custom_call.1} parent=1 // loop_body
      %s20 = ssub.s32 %s15, 1
      %s21 = ssub.s32 %s15, 2
      %s28 = sadd.s32 1, %s23
      %p29 = scmp.ge.s32.totalorder %s28, 2
      %s30 = scalar_select %p29, 0, %s28
      %s31 = sadd.s32 1, %s22
      %s32 = scalar_select %p29, %s31, %s22
      %p33 = scmp.ge.s32.totalorder %s32, 2
      %s34 = scalar_select %p33, 0, %s32
      %s36 = sadd.s32 %s35, 1
      %p39 = scmp.eq.s32.totalorder %s15, 3
      %p40 = scmp.ne.s32.totalorder %s35, %s37
      %p41 = scmp.eq.s32.totalorder %s15, 0
      %p42 = por %p40, %p41
      %p43 = scmp.ne.s32.totalorder %s35, %s37
      %p44 = scmp.eq.s32.totalorder %s20, 3
      %p45 = por %p43, %p44
      %p46 = scmp.ne.s32.totalorder %s37, %s38
      %p47 = scmp.eq.s32.totalorder %s20, 0
      %p48 = por %p46, %p47
      %p49 = scmp.ne.s32.totalorder %s37, %s38
      %p50 = scmp.eq.s32.totalorder %s21, 3
      %p51 = por %p49, %p50
      %p53 = scmp.ne.s32.totalorder %s38, %s52
      %p54 = scmp.eq.s32.totalorder %s21, 0
      %p55 = por %p53, %p54
      %s57 = sadd.s32 %s56, 1
      %p60 = scmp.eq.s32.totalorder %s15, 3
      %p61 = scmp.ne.s32.totalorder %s56, %s58
      %p62 = scmp.eq.s32.totalorder %s15, 0
      %p63 = por %p61, %p62
      %p64 = scmp.ne.s32.totalorder %s56, %s58
      %p65 = scmp.eq.s32.totalorder %s20, 3
      %p66 = por %p64, %p65
      %p67 = scmp.ne.s32.totalorder %s58, %s59
      %p68 = scmp.eq.s32.totalorder %s20, 0
      %p69 = por %p67, %p68
      %p70 = scmp.ne.s32.totalorder %s58, %s59
      %p71 = scmp.eq.s32.totalorder %s21, 3
      %p72 = por %p70, %p71
      %p74 = scmp.ne.s32.totalorder %s59, %s73
      %p75 = scmp.eq.s32.totalorder %s21, 0
      %p76 = por %p74, %p75
      %s77 = ssub.s32 %s22, %s34
      %s78 = ssub.s32 %s23, %s30
      %s79 = sor.u32 %s77, %s78
      %p80 = scmp.eq.s32.totalorder %s79, 0
      %s82 = sadd.s32 %s81, 1
      %s83 = scalar_select %p80, %s81, %s82
      %p86 = pneg %p80
      %p87 = scmp.eq.s32.totalorder %s15, 3
      %p88 = por %p86, %p87
      %p89 = scmp.ne.s32.totalorder %s81, %s84
      %p90 = scmp.eq.s32.totalorder %s15, 0
      %p91 = por %p89, %p90
      %p92 = scmp.ne.s32.totalorder %s81, %s84
      %p93 = scmp.eq.s32.totalorder %s20, 3
      %p94 = por %p92, %p93
      %p95 = scmp.ne.s32.totalorder %s84, %s85
      %p96 = scmp.eq.s32.totalorder %s20, 0
      %p97 = por %p95, %p96
      %p98 = scmp.ne.s32.totalorder %s84, %s85
      %p99 = scmp.eq.s32.totalorder %s21, 3
      %p100 = por %p98, %p99
      %p102 = scmp.ne.s32.totalorder %s85, %s101
      %p103 = scmp.eq.s32.totalorder %s21, 0
      %p104 = por %p102, %p103
      %s106 = sadd.s32 %s105, 1
      %p109 = scmp.eq.s32.totalorder %s15, 3
      %p110 = scmp.ne.s32.totalorder %s105, %s107
      %p111 = scmp.eq.s32.totalorder %s15, 0
      %p112 = por %p110, %p111
      %p113 = scmp.ne.s32.totalorder %s105, %s107
      %p114 = scmp.eq.s32.totalorder %s20, 3
      %p115 = por %p113, %p114
      %p116 = scmp.ne.s32.totalorder %s107, %s108
      %p117 = scmp.eq.s32.totalorder %s20, 0
      %p118 = por %p116, %p117
      %p119 = scmp.ne.s32.totalorder %s107, %s108
      %p120 = scmp.eq.s32.totalorder %s21, 3
      %p121 = por %p119, %p120
      %p123 = scmp.ne.s32.totalorder %s108, %s122
      %p124 = scmp.eq.s32.totalorder %s21, 0
      %p125 = por %p123, %p124
      %s127 = sadd.s32 %s126, 1
      %p130 = scmp.eq.s32.totalorder %s15, 3
      %p131 = scmp.ne.s32.totalorder %s126, %s128
      %p132 = scmp.eq.s32.totalorder %s15, 0
      %p133 = por %p131, %p132
      %p134 = scmp.ne.s32.totalorder %s126, %s128
      %p135 = scmp.eq.s32.totalorder %s20, 3
      %p136 = por %p134, %p135
      %p137 = scmp.ne.s32.totalorder %s128, %s129
      %p138 = scmp.eq.s32.totalorder %s20, 0
      %p139 = por %p137, %p138
      %p140 = scmp.ne.s32.totalorder %s128, %s129
      %p141 = scmp.eq.s32.totalorder %s21, 3
      %p142 = por %p140, %p141
      %p144 = scmp.ne.s32.totalorder %s129, %s143
      %p145 = scmp.eq.s32.totalorder %s21, 0
      %p146 = por %p144, %p145
      %s148 = sadd.s32 %s147, 1
      %p151 = scmp.eq.s32.totalorder %s15, 3
      %p152 = scmp.ne.s32.totalorder %s147, %s149
      %p153 = scmp.eq.s32.totalorder %s15, 0
      %p154 = por %p152, %p153
      %p155 = scmp.ne.s32.totalorder %s147, %s149
      %p156 = scmp.eq.s32.totalorder %s20, 3
      %p157 = por %p155, %p156
      %p158 = scmp.ne.s32.totalorder %s149, %s150
      %p159 = scmp.eq.s32.totalorder %s20, 0
      %p160 = por %p158, %p159
      %p161 = scmp.ne.s32.totalorder %s149, %s150
      %p162 = scmp.eq.s32.totalorder %s21, 3
      %p163 = por %p161, %p162
      %p165 = scmp.ne.s32.totalorder %s150, %s164
      %p166 = scmp.eq.s32.totalorder %s21, 0
      %p167 = por %p165, %p166
      %s169 = sadd.s32 %s168, 1
      %p172 = scmp.eq.s32.totalorder %s15, 3
      %p173 = scmp.ne.s32.totalorder %s168, %s170
      %p174 = scmp.eq.s32.totalorder %s15, 0
      %p175 = por %p173, %p174
      %p176 = scmp.ne.s32.totalorder %s168, %s170
      %p177 = scmp.eq.s32.totalorder %s20, 3
      %p178 = por %p176, %p177
      %p179 = scmp.ne.s32.totalorder %s170, %s171
      %p180 = scmp.eq.s32.totalorder %s20, 0
      %p181 = por %p179, %p180
      %p182 = scmp.ne.s32.totalorder %s170, %s171
      %p183 = scmp.eq.s32.totalorder %s21, 3
      %p184 = por %p182, %p183
      %p186 = scmp.ne.s32.totalorder %s171, %s185
      %p187 = scmp.eq.s32.totalorder %s21, 0
      %p188 = por %p186, %p187
      %s189 = ssub.s32 %s22, %s34
      %p190 = scmp.eq.s32.totalorder %s189, 0
      %s192 = sadd.s32 %s191, 1
      %s193 = scalar_select %p190, %s191, %s192
      %p196 = pneg %p190
      %p197 = scmp.eq.s32.totalorder %s15, 3
      %p198 = por %p196, %p197
      %p199 = scmp.ne.s32.totalorder %s191, %s194
      %p200 = scmp.eq.s32.totalorder %s15, 0
      %p201 = por %p199, %p200
      %p202 = scmp.ne.s32.totalorder %s191, %s194
      %p203 = scmp.eq.s32.totalorder %s20, 3
      %p204 = por %p202, %p203
      %p205 = scmp.ne.s32.totalorder %s194, %s195
      %p206 = scmp.eq.s32.totalorder %s20, 0
      %p207 = por %p205, %p206
      %p208 = scmp.ne.s32.totalorder %s194, %s195
      %p209 = scmp.eq.s32.totalorder %s21, 3
      %p210 = por %p208, %p209
      %p212 = scmp.ne.s32.totalorder %s195, %s211
      %p213 = scmp.eq.s32.totalorder %s21, 0
      %p214 = por %p212, %p213
      %p215 = scmp.le.s32.totalorder 1, %s15
      %p216 = scmp.lt.s32.totalorder %s15, 5
      %p217 = pnand %p215, %p216
      %p218 = pneg %p217
      // Predicated region
      $region9: #{tpu_custom_call.1} parent=5 // pred_check
        _
      $region10: #{tpu_custom_call.1} parent=5 // pred_check_branch
        %220 = sbr.rel (%p217) target = $region12
      $region11: #{tpu_custom_call.1} parent=5 // pred_region
        %s221 = ssub.s32 %s15, 1
        // Predicated region
        $region13: #{tpu_custom_call.1} parent=11 // pred_check
          %p222 = pneg %p48
        $region14: #{tpu_custom_call.1} parent=11 // pred_check_branch
          %224 = sbr.rel (%p222) target = $region16
        $region15: #{tpu_custom_call.1} parent=11 // pred_region
          %226 = vsyncadd [#allocation4], 0
          %s228 = sshll.u32 %s0, 4
          %s229 = int_to_ptr.vmem [resolvable:$true] %s228
          %231 = dma.vmem_to_smem %s229, 16, [#allocation3], [#allocation4]
        $region16: #{tpu_custom_call.1} parent=11 // pred_fallthru
          _
        // Predicated region
        $region17: #{tpu_custom_call.1} parent=11 // pred_check
          %p232 = pneg %p69
        $region18: #{tpu_custom_call.1} parent=11 // pred_check_branch
          %234 = sbr.rel (%p232) target = $region20
        $region19: #{tpu_custom_call.1} parent=11 // pred_region
          %236 = vsyncadd [#allocation6], 0
          %s238 = sshll.u32 %s1, 4
          %s239 = int_to_ptr.vmem [resolvable:$true] %s238
          %241 = dma.vmem_to_smem %s239, 16, [#allocation5], [#allocation6]
        $region20: #{tpu_custom_call.1} parent=11 // pred_fallthru
          _
        // Predicated region
        $region21: #{tpu_custom_call.1} parent=11 // pred_check
          %p242 = pneg %p118
        $region22: #{tpu_custom_call.1} parent=11 // pred_check_branch
          %244 = sbr.rel (%p242) target = $region24
        $region23: #{tpu_custom_call.1} parent=11 // pred_region
          _
        $region24: #{tpu_custom_call.1} parent=11 // pred_fallthru
          _
        // Predicated region
        $region25: #{tpu_custom_call.1} parent=11 // pred_check
          %p245 = pneg %p139
        $region26: #{tpu_custom_call.1} parent=11 // pred_check_branch
          %247 = sbr.rel (%p245) target = $region28
        $region27: #{tpu_custom_call.1} parent=11 // pred_region
          _
        $region28: #{tpu_custom_call.1} parent=11 // pred_fallthru
          _
        // Predicated region
        $region29: #{tpu_custom_call.1} parent=11 // pred_check
          %p248 = pneg %p160
        $region30: #{tpu_custom_call.1} parent=11 // pred_check_branch
          %250 = sbr.rel (%p248) target = $region32
        $region31: #{tpu_custom_call.1} parent=11 // pred_region
          _
        $region32: #{tpu_custom_call.1} parent=11 // pred_fallthru
          _
        // Predicated region
        $region33: #{tpu_custom_call.1} parent=11 // pred_check
          %p251 = pneg %p181
        $region34: #{tpu_custom_call.1} parent=11 // pred_check_branch
          %253 = sbr.rel (%p251) target = $region36
        $region35: #{tpu_custom_call.1} parent=11 // pred_region
          _
        $region36: #{tpu_custom_call.1} parent=11 // pred_fallthru
          _
      $region12: #{tpu_custom_call.1} parent=5 // pred_fallthru
        _
      %p254 = scmp.lt.s32.totalorder %s15, 4
      // Predicated region
      $region37: #{tpu_custom_call.1} parent=5 // pred_check
        %p255 = pneg %p254
      $region38: #{tpu_custom_call.1} parent=5 // pred_check_branch
        %257 = sbr.rel (%p255) target = $region40
      $region39: #{tpu_custom_call.1} parent=5 // pred_region
        // Predicated region
        $region41: #{tpu_custom_call.1} parent=39 // pred_check
          %p258 = pneg %p91
        $region42: #{tpu_custom_call.1} parent=39 // pred_check_branch
          %260 = sbr.rel (%p258) target = $region44
        $region43: #{tpu_custom_call.1} parent=39 // pred_region
          %p261 = scmp.lt.s32.totalorder %s22, 1
          %s262 = scalar_select %p261, %s22, 1
          %p263 = scmp.lt.s32.totalorder %s23, 1
          %s264 = scalar_select %p263, %s23, 1
          %s265 = smul.addr %s262, 2
          %s266 = sadd.s32 %s264, %s265
          %s267 = smul.addr %s266, 4
          %s268 = scalar_lea.vmem %s2, %s267
        $region44: #{tpu_custom_call.1} parent=39 // pred_fallthru
          _
      $region40: #{tpu_custom_call.1} parent=5 // pred_fallthru
        _
      %p269 = scmp.le.s32.totalorder 1, %s15
      %p270 = scmp.lt.s32.totalorder %s15, 5
      %p271 = pnand %p269, %p270
      %p272 = pneg %p271
      // Predicated region
      $region45: #{tpu_custom_call.1} parent=5 // pred_check
        _
      $region46: #{tpu_custom_call.1} parent=5 // pred_check_branch
        %274 = sbr.rel (%p271) target = $region48
      $region47: #{tpu_custom_call.1} parent=5 // pred_region
        %s275 = ssub.s32 %s15, 1
        // Predicated region
        $region49: #{tpu_custom_call.1} parent=47 // pred_check
          %p276 = pneg %p48
        $region50: #{tpu_custom_call.1} parent=47 // pred_check_branch
          %278 = sbr.rel (%p276) target = $region52
        $region51: #{tpu_custom_call.1} parent=47 // pred_region
          %280 = dma.done [#allocation4], 16
        $region52: #{tpu_custom_call.1} parent=47 // pred_fallthru
          _
        // Predicated region
        $region53: #{tpu_custom_call.1} parent=47 // pred_check
          %p281 = pneg %p69
        $region54: #{tpu_custom_call.1} parent=47 // pred_check_branch
          %283 = sbr.rel (%p281) target = $region56
        $region55: #{tpu_custom_call.1} parent=47 // pred_region
          %285 = dma.done [#allocation6], 16
        $region56: #{tpu_custom_call.1} parent=47 // pred_fallthru
          _
        %286 = sfence
        %p287 = pneg %p48
        %p288 = pneg %p45
        %p289 = pneg %p69
        %p290 = pneg %p66
        %p291 = scmp.lt.s32.totalorder %s24, 1
        %s292 = scalar_select %p291, %s24, 1
        %p293 = scmp.lt.s32.totalorder %s25, 1
        %s294 = scalar_select %p293, %s25, 1
        %s295 = smul.addr %s292, 2
        %s296 = sadd.s32 %s294, %s295
        %s297 = smul.addr %s296, 4
        %s298 = scalar_lea.vmem %s2, %s297
        %p299 = pneg %p97
        %p300 = pneg %p94
        %p301 = pneg %p118
        %p302 = pneg %p115
        %p303 = pneg %p139
        %p304 = pneg %p136
        %p305 = pneg %p160
        %p306 = pneg %p157
        %p307 = pneg %p181
        %p308 = pneg %p178
        %p309 = pneg %p207
        %p310 = pneg %p204
        %p311 = scmp.lt.s32.totalorder %s24, 1
        %s312 = scalar_select %p311, %s24, 1
        %s313 = smul.addr %s312, 4
        %s314 = scalar_lea.vmem %s7, %s313
        %p315 = scmp.lt.s32.totalorder %s24, 1
        %s316 = scalar_select %p315, %s24, 1
        %p317 = scmp.lt.s32.totalorder %s25, 1
        %s318 = scalar_select %p317, %s25, 1
        %s319 = smul.addr %s316, 2
        %s320 = sadd.s32 %s318, %s319
        %s321 = smul.addr %s320, 4
        %s322 = scalar_lea.vmem %s2, %s321
        %p323 = scmp.lt.s32.totalorder %s24, 1
        %s324 = scalar_select %p323, %s24, 1
        %s325 = smul.addr %s324, 4
        %s326 = scalar_lea.vmem %s7, %s325
        %p327 = scmp.eq.s32.totalorder %s25, 0
        // Predicated region
        $region57: #{tpu_custom_call.1} parent=47 // pred_check
          %p328 = pneg %p327
        $region58: #{tpu_custom_call.1} parent=47 // pred_check_branch
          %330 = sbr.rel (%p328) target = $region60
        $region59: #{tpu_custom_call.1} parent=47 // pred_region
          %vm331 = vcmask 3072
          %332 = vst.msk [vmem:[#allocation2] sm:$0xf] %vm331, 0.0
          %333 = vst.msk [vmem:[#allocation2 + $0x4] sm:$0xf] %vm331, 0.0
        $region60: #{tpu_custom_call.1} parent=47 // pred_fallthru
          _
        %v334 = vld [vmem:[%s322] sm:$0xf]
        %s335 = sld [smem:[#allocation3]]
        %v336 = vstv %s335
        %v337 = vsub.f32 %v334, %v336
        %v338 = vmul.f32 %v337, %v337
        %s339 = sld [smem:[#allocation5]]
        %v340 = vstv %s339
        %v341 = vmul.f32 %v338, %v340
        %v342 = vmul.f32 %v341, 1.442695
        %v343 = vpow.pop %v342
        %v344 = vld [vmem:[#allocation2] sm:$0xf]
        %vm345 = vcmask 1043456
        %v346 = vsel %vm345, %v343, 0.0
        %347 = vadd.xlane.f32.xlu0 %v346
        %v348 = vpop.xlane.xlu0 %347
        %v349 = vadd.f32 %v344, %v348
        %vm350 = vcmask 3072
        %351 = vst.msk [vmem:[#allocation2] sm:$0xf] %vm350, %v349
        %v352 = vld [vmem:[%s322] sm:$0xf]
        %s353 = sld [smem:[#allocation3 + $0x1]]
        %v354 = vstv %s353
        %v355 = vsub.f32 %v352, %v354
        %v356 = vmul.f32 %v355, %v355
        %s357 = sld [smem:[#allocation5 + $0x1]]
        %v358 = vstv %s357
        %v359 = vmul.f32 %v356, %v358
        %v360 = vmul.f32 %v359, 1.442695
        %v361 = vpow.pop %v360
        %s362 = scalar_lea.vmem [#allocation2], 4
        %v363 = vld [vmem:[%s362] sm:$0xf]
        %v364 = vsel %vm345, %v361, 0.0
        %365 = vadd.xlane.f32.xlu0 %v364
        %v366 = vpop.xlane.xlu0 %365
        %v367 = vadd.f32 %v363, %v366
        %368 = vst.msk [vmem:[%s362] sm:$0xf] %vm350, %v367
        %p369 = scmp.eq.s32.totalorder %s25, 1
        // Predicated region
        $region61: #{tpu_custom_call.1} parent=47 // pred_check
          %p370 = pneg %p369
        $region62: #{tpu_custom_call.1} parent=47 // pred_check_branch
          %372 = sbr.rel (%p370) target = $region64
        $region63: #{tpu_custom_call.1} parent=47 // pred_region
          %v373 = vld [vmem:[#allocation2] sm:$0xf]
          %v374 = vld [vmem:[#allocation2 + $0x4] sm:$0xf]
          %v375 = vmul.f32 %v373, 0.00390625
          %v376 = vmul.f32 %v374, 0.00390625
          %v377 = vld [vmem:[%s4] sm:$0x1]
          %v378 = vld [vmem:[%s3] sm:$0xf]
          %380 = vset.pattern.permute.xlu0 0
          %381 = vperm.xlu0 %380, %v375
          %v382 = vpop.permute.xlu0 %381
          %v384 = vmul.f32 %v378, %v382
          %vm385 = vcmask 11264
          %v386 = vsel %vm385, %v384, 0.0
          %v387 = vrot.slane %v386, 4
          %v388 = vadd.f32 %v386, %v387
          %v389 = vrot.slane %v388, 2
          %v390 = vadd.f32 %v388, %v389
          %v391 = vrot.slane %v390, 1
          %v392 = vadd.f32 %v390, %v391
          %v393 = vadd.f32 %v377, %v392
          %s394 = scalar_lea.vmem %s3, 4
          %v395 = vld [vmem:[%s394] sm:$0xf]
          %397 = vset.pattern.permute.xlu0 0
          %398 = vperm.xlu0 %397, %v376
          %v399 = vpop.permute.xlu0 %398
          %v401 = vmul.f32 %v395, %v399
          %v402 = vsel %vm385, %v401, 0.0
          %v403 = vrot.slane %v402, 4
          %v404 = vadd.f32 %v402, %v403
          %v405 = vrot.slane %v404, 2
          %v406 = vadd.f32 %v404, %v405
          %v407 = vrot.slane %v406, 1
          %v408 = vadd.f32 %v406, %v407
          %v409 = vadd.f32 %v393, %v408
          %v410 = vsub.f32 0.0, %v409
          %v411 = vmul.f32 %v410, 1.442695
          %v412 = vpow.pop %v411
          %v413 = vadd.f32 %v412, 1.0
          %v414 = vrcp.pop %v413
          %v415 = vmul.f32 %v413, %v414
          %v416 = vsub.f32 1.0, %v415
          %v417 = vmul.f32 %v414, %v416
          %v418 = vadd.f32 %v414, %v417
          %vm419 = vweird.f32 %v413
          %vm420 = vweird.f32 %v414
          %vm421 = vmor %vm419, %vm420
          %v422 = vsel %vm421, %v414, %v418
          %v423 = vand.u32 2147483647, %v413
          %vm424 = vcmp.eq.f32.partialorder %v423, 8.507059e+37
          %v425 = vand.u32 %v413, 2147483648
          %v426 = vor.u32 1.1754944e-38, %v425
          %v427 = vsel %vm424, %v426, %v422
          %v428 = vmul.f32 1.0, %v427
          %v429 = vmul.f32 %v409, %v428
          %v430 = vld [vmem:[%s5] sm:$0xf]
          %v432 = vperm.slane %v429, 0
          %v434 = vmul.f32 %v430, %v432
          %v435 = vsel %vm385, %v434, 0.0
          %436 = vadd.xlane.f32.xlu0 %v435
          %v437 = vpop.xlane.xlu0 %436
          %v438 = vld [vmem:[%s6] sm:$0xf]
          %v439 = vadd.f32 %v437, %v438
          %v440 = vsub.f32 0.0, %v439
          %v441 = vmul.f32 %v440, 1.442695
          %v442 = vpow.pop %v441
          %v443 = vadd.f32 %v442, 1.0
          %v444 = vrcp.pop %v443
          %v445 = vmul.f32 %v443, %v444
          %v446 = vsub.f32 1.0, %v445
          %v447 = vmul.f32 %v444, %v446
          %v448 = vadd.f32 %v444, %v447
          %vm449 = vweird.f32 %v443
          %vm450 = vweird.f32 %v444
          %vm451 = vmor %vm449, %vm450
          %v452 = vsel %vm451, %v444, %v448
          %v453 = vand.u32 2147483647, %v443
          %vm454 = vcmp.eq.f32.partialorder %v453, 8.507059e+37
          %v455 = vand.u32 %v443, 2147483648
          %v456 = vor.u32 1.1754944e-38, %v455
          %v457 = vsel %vm454, %v456, %v452
          %v458 = vmul.f32 1.0, %v457
          %v459 = vadd.f32 %v458, 1.0
          %460 = vst.msk [vmem:[%s326] sm:$0xf] %vm350, %v459
        $region64: #{tpu_custom_call.1} parent=47 // pred_fallthru
          _
        %p461 = scmp.lt.s32.totalorder %s24, 1
        %s462 = scalar_select %p461, %s24, 1
        %s463 = smul.addr %s462, 4
        %s464 = scalar_lea.vmem %s7, %s463
        // Predicated region
        $region65: #{tpu_custom_call.1} parent=47 // pred_check
          %p465 = pneg %p204
        $region66: #{tpu_custom_call.1} parent=47 // pred_check_branch
          %467 = sbr.rel (%p465) target = $region68
        $region67: #{tpu_custom_call.1} parent=47 // pred_region
          _
        $region68: #{tpu_custom_call.1} parent=47 // pred_fallthru
          _
      $region48: #{tpu_custom_call.1} parent=5 // pred_fallthru
        _
      %p468 = scmp.le.s32.totalorder 2, %s15
      // Predicated region
      $region69: #{tpu_custom_call.1} parent=5 // pred_check
        %p469 = pneg %p468
      $region70: #{tpu_custom_call.1} parent=5 // pred_check_branch
        %471 = sbr.rel (%p469) target = $region72
      $region71: #{tpu_custom_call.1} parent=5 // pred_region
        %s472 = ssub.s32 %s15, 2
        // Predicated region
        $region73: #{tpu_custom_call.1} parent=71 // pred_check
          %p473 = pneg %p210
        $region74: #{tpu_custom_call.1} parent=71 // pred_check_branch
          %475 = sbr.rel (%p473) target = $region76
        $region75: #{tpu_custom_call.1} parent=71 // pred_region
          %p476 = scmp.lt.s32.totalorder %s26, 1
          %s477 = scalar_select %p476, %s26, 1
          %s478 = smul.addr %s477, 4
          %s479 = scalar_lea.vmem %s7, %s478
        $region76: #{tpu_custom_call.1} parent=71 // pred_fallthru
          _
      $region72: #{tpu_custom_call.1} parent=5 // pred_fallthru
        _
    $region6: #{tpu_custom_call.1} parent=1 // loop_footer
      %s19 = sadd.s32 1, %s15
    $region7: #{tpu_custom_call.1} parent=1 // loop_footer_branch
      %14 = sbr.rel target = $region3
    $region8: #{tpu_custom_call.1} parent=1 // loop_exit
      _
    %480 = vsyncpa [#allocation4], 1
    %s481 = scalar_lea.sflag [#allocation4], 1
    %482 = vsyncpa %s481, 1
    %483 = vsyncpa [#allocation6], 1

</llo_original>
